<compile_context>
chip_gen: v5e
topology: v5e:2x2
jax: 0.10.0
libtpu: 0.0.40
codegen_flags: <defaults>
</compile_context>

<pallas_src>
import jax
import jax.numpy as jnp
from jax.experimental import pallas as pl
from jax.experimental.pallas import tpu as pltpu

HIDDEN1 = 32    # GCNConv(node_features, 32)
HIDDEN2 = 16    # GCNConv(32, 16)
LABEL_H = 32    # labels: Linear(C, 32)
OUT_DIM = 2     # combine: Linear(2C, 2)
LANE = 128      # weight-slab lane width


def _round_up(v, m):
    return (v + m - 1) // m * m


def _slab_layout(f, c):
    """Row offsets (sublane-aligned) of each packed weight inside the slab."""
    g1 = 0
    g2 = g1 + _round_up(f, 8)            # w_g1: (f, 32)
    l1 = g2 + HIDDEN1                    # w_g2: (32, 16)
    l2 = l1 + _round_up(c, 8)            # w_l1: (c, 32)
    ch = l2 + LABEL_H                    # w_l2: (32, c)
    cy = ch + _round_up(HIDDEN2, 8)      # wch_folded: (16, 2)
    b = cy + _round_up(c, 8)             # wcy: (c, 2)
    rows = _round_up(b + 5, 8)           # 5 bias rows
    return dict(g1=g1, g2=g2, l1=l1, l2=l2, ch=ch, cy=cy, b=b, rows=rows)


def build_norm_adj(edge_index, edge_weight, num_nodes):
    """Dense D^-1/2 (A + I) D^-1/2, matching torch_geometric gcn_norm
    (add_self_loops=True, flow='source_to_target').  Hoist: call once per graph."""
    src, dst = edge_index[0], edge_index[1]
    loop = jnp.arange(num_nodes, dtype=src.dtype)
    src = jnp.concatenate([src, loop])
    dst = jnp.concatenate([dst, loop])
    ew = jnp.concatenate([edge_weight.astype(jnp.float32),
                          jnp.ones((num_nodes,), jnp.float32)])
    deg = jnp.zeros((num_nodes,), jnp.float32).at[dst].add(ew)
    dinv = jnp.where(deg > 0, jax.lax.rsqrt(deg), 0.0)
    norm = dinv[src] * ew * dinv[dst]
    # message src -> dst:  out[dst] += norm * (x W)[src]   =>  A_hat[dst, src] = norm
    return jnp.zeros((num_nodes, num_nodes), jnp.float32).at[dst, src].add(norm)


def pack_params(params):
    """One-time parameter preprocessing: fold the node-branch final Linear into
    the combine head and pack everything into a single (rows, 128) f32 slab."""
    f = params["w_g1"].shape[0]
    c = params["w_lin"].shape[1]
    lay = _slab_layout(f, c)

    w_comb = params["w_comb"]                              # (2C, 2)
    wch_f = params["w_lin"] @ w_comb[:c]                   # (16, 2)  folded
    bc_f = params["b_comb"] + params["b_lin"] @ w_comb[:c]  # (1, 2)   folded
    wcy = w_comb[c:]                                       # (C, 2)

    slab = jnp.zeros((lay["rows"], LANE), jnp.float32)
    slab = slab.at[lay["g1"]:lay["g1"] + f, :HIDDEN1].set(params["w_g1"])
    slab = slab.at[lay["g2"]:lay["g2"] + HIDDEN1, :HIDDEN2].set(params["w_g2"])
    slab = slab.at[lay["l1"]:lay["l1"] + c, :LABEL_H].set(params["w_l1"])
    slab = slab.at[lay["l2"]:lay["l2"] + LABEL_H, :c].set(params["w_l2"])
    slab = slab.at[lay["ch"]:lay["ch"] + HIDDEN2, :OUT_DIM].set(wch_f)
    slab = slab.at[lay["cy"]:lay["cy"] + c, :OUT_DIM].set(wcy)
    b = lay["b"]
    slab = slab.at[b + 0, :HIDDEN1].set(params["b_g1"][0])
    slab = slab.at[b + 1, :HIDDEN2].set(params["b_g2"][0])
    slab = slab.at[b + 2, :LABEL_H].set(params["b_l1"][0])
    slab = slab.at[b + 3, :c].set(params["b_l2"][0])
    slab = slab.at[b + 4, :OUT_DIM].set(bc_f[0])
    return slab, (f, c)


def _make_kernel(f, c, lay):
    g1, g2, l1, l2, ch, cy, b = (lay[k] for k in ("g1", "g2", "l1", "l2", "ch", "cy", "b"))

    def kernel(a_ref, x_ref, y_ref, w_ref, out_ref):
        a = a_ref[...]                                   # (N, N) normalized adjacency
        x = x_ref[...]                                   # (N, F)
        y = y_ref[...]                                   # (N, C)

        # ---- node branch: conv1 -> relu -> conv2 (final Linear folded into head)
        h = jnp.dot(x, w_ref[g1:g1 + f, :HIDDEN1], preferred_element_type=jnp.float32)
        h = jnp.dot(a, h, preferred_element_type=jnp.float32) + w_ref[b:b + 1, :HIDDEN1]
        h = jnp.maximum(h, 0.0)
        h = jnp.dot(h, w_ref[g2:g2 + HIDDEN1, :HIDDEN2], preferred_element_type=jnp.float32)
        h = jnp.dot(a, h, preferred_element_type=jnp.float32) + w_ref[b + 1:b + 2, :HIDDEN2]

        # ---- label branch: Linear -> ReLU -> Linear -> ReLU
        yy = (jnp.dot(y, w_ref[l1:l1 + c, :LABEL_H], preferred_element_type=jnp.float32)
              + w_ref[b + 2:b + 3, :LABEL_H])
        yy = jnp.maximum(yy, 0.0)
        yy = (jnp.dot(yy, w_ref[l2:l2 + LABEL_H, :c], preferred_element_type=jnp.float32)
              + w_ref[b + 3:b + 4, :c])
        yy = jnp.maximum(yy, 0.0)                        # (N, C)

        # ---- combine head (concat folded into split weights; w_lin pre-folded)
        logits = (jnp.dot(h, w_ref[ch:ch + HIDDEN2, :OUT_DIM], preferred_element_type=jnp.float32)
                  + jnp.dot(yy, w_ref[cy:cy + c, :OUT_DIM], preferred_element_type=jnp.float32)
                  + w_ref[b + 4:b + 5, :OUT_DIM])        # (N, 2)

        # ---- softmax over the 2 real logits only
        m = jnp.max(logits, axis=1, keepdims=True)
        e = jnp.exp(logits - m)
        denom = jnp.sum(e, axis=1, keepdims=True)
        out_ref[...] = (e * pl.reciprocal(denom, approx=False)).astype(out_ref.dtype)

    return kernel


def gcn_forward(x, y, a_hat, slab):
    """Hot-path Pallas forward. a_hat / slab are precomputed (hoisted)."""
    n, f = x.shape
    c = y.shape[1]
    lay = _slab_layout(f, c)
    kernel = _make_kernel(f, c, lay)

    flops = 2 * n * (f * HIDDEN1 + n * HIDDEN1 + HIDDEN1 * HIDDEN2 + n * HIDDEN2
                     + c * LABEL_H + LABEL_H * c + HIDDEN2 * OUT_DIM + c * OUT_DIM)
    bytes_accessed = 4 * (n * n + n * f + n * c + lay["rows"] * LANE + n * OUT_DIM)
    cost = pl.CostEstimate(flops=flops, transcendentals=n * OUT_DIM,
                           bytes_accessed=bytes_accessed)

    # NOTE: for large graphs (v7x dense f32 A_hat overflows VMEM near N~4096,
    # v5e's 16 MiB scoped default far earlier) switch to a row-tiled A_hat
    # (grid=(hop, N//tm), "parallel" row axis, persistent (N,32) hop-1 scratch).
    return pl.pallas_call(
        kernel,
        out_shape=jax.ShapeDtypeStruct((n, OUT_DIM), jnp.float32),
        grid=(1,),
        in_specs=[pl.BlockSpec(a_hat.shape, lambda i: (0, 0)),
                  pl.BlockSpec(x.shape, lambda i: (0, 0)),
                  pl.BlockSpec(y.shape, lambda i: (0, 0)),
                  pl.BlockSpec(slab.shape, lambda i: (0, 0))],
        out_specs=pl.BlockSpec((n, OUT_DIM), lambda i: (0, 0)),
        compiler_params=pltpu.CompilerParams(dimension_semantics=("arbitrary",)),
        cost_estimate=cost,
    )(a_hat, x, y, slab)


def gcn_module_forward(x, y, edge_index, edge_weight, params, H=None):
    """Convenience wrapper matching the PyTorch module signature."""
    a_hat = build_norm_adj(edge_index, edge_weight, x.shape[0])
    slab, _ = pack_params(params)
    return gcn_forward(x, y, a_hat, slab), H


def _reference_forward(x, y, edge_index, edge_weight, params):
    a = build_norm_adj(edge_index, edge_weight, x.shape[0])
    h = a @ (x @ params["w_g1"]) + params["b_g1"]
    h = jax.nn.relu(h)
    h = a @ (h @ params["w_g2"]) + params["b_g2"]
    h = h @ params["w_lin"] + params["b_lin"]
    yy = jax.nn.relu(y @ params["w_l1"] + params["b_l1"])
    yy = jax.nn.relu(yy @ params["w_l2"] + params["b_l2"])
    z = jnp.concatenate([h, yy], axis=1) @ params["w_comb"] + params["b_comb"]
    return jax.nn.softmax(z, axis=1)


def _init_params(key, node_features, num_classes):
    f, c = node_features, num_classes
    ks = jax.random.split(key, 10)

    def glorot(k, shape):
        lim = (6.0 / (shape[0] + shape[1])) ** 0.5
        return jax.random.uniform(k, shape, jnp.float32, -lim, lim)

    def linear(kw, kb, fan_in, fan_out):
        # torch Linear default init; weight stored pre-transposed as (in, out)
        lim = 1.0 / (fan_in ** 0.5)
        w = jax.random.uniform(kw, (fan_in, fan_out), jnp.float32, -lim, lim)
        b = jax.random.uniform(kb, (1, fan_out), jnp.float32, -lim, lim)
        return w, b

    w_lin, b_lin = linear(ks[2], ks[3], HIDDEN2, c)
    w_l1, b_l1 = linear(ks[4], ks[5], c, LABEL_H)
    w_l2, b_l2 = linear(ks[6], ks[7], LABEL_H, c)
    w_comb, b_comb = linear(ks[8], ks[9], 2 * c, OUT_DIM)
    return {
        "w_g1": glorot(ks[0], (f, HIDDEN1)), "b_g1": jnp.zeros((1, HIDDEN1), jnp.float32),
        "w_g2": glorot(ks[1], (HIDDEN1, HIDDEN2)), "b_g2": jnp.zeros((1, HIDDEN2), jnp.float32),
        "w_lin": w_lin, "b_lin": b_lin,
        "w_l1": w_l1, "b_l1": b_l1,
        "w_l2": w_l2, "b_l2": b_l2,
        "w_comb": w_comb, "b_comb": b_comb,
    }


if __name__ == "__main__":
    NODE_FEATURES = 8
    NUM_CLASSES = 4
    N_NODES = 128

    key = jax.random.PRNGKey(0)
    k_x, k_y, k_w, k_p = jax.random.split(key, 4)
    x = jax.random.normal(k_x, (N_NODES, NODE_FEATURES), jnp.float32)
    y = jax.random.normal(k_y, (N_NODES, NUM_CLASSES), jnp.float32)

    # Undirected ring graph with positive edge weights.
    idx = jnp.arange(N_NODES, dtype=jnp.int32)
    nxt = (idx + 1) % N_NODES
    edge_index = jnp.stack([jnp.concatenate([idx, nxt]),
                            jnp.concatenate([nxt, idx])], axis=0)
    edge_weight = jax.random.uniform(k_w, (2 * N_NODES,), jnp.float32, 0.5, 1.5)

    params = _init_params(k_p, NODE_FEATURES, NUM_CLASSES)

    # ---- hoisted one-time preprocessing (graph + parameter packing) ----
    a_hat = build_norm_adj(edge_index, edge_weight, N_NODES)
    slab, _ = pack_params(params)

    # ---- hot path: jitted Pallas forward only ----
    forward = jax.jit(gcn_forward)
    out = jax.block_until_ready(forward(x, y, a_hat, slab))
    H = None  # module passes H through unchanged

    with jax.default_matmul_precision("highest"):
        ref = _reference_forward(x, y, edge_index, edge_weight, params)

    assert out.shape == (N_NODES, OUT_DIM)
    assert H is None
    assert jnp.allclose(out, ref, atol=1e-4, rtol=1e-4), "mismatch vs JAX reference"

    print("KERNEL_OK")
</pallas_src>

<mosaic_0001>
module attributes {stable_mosaic.version = 11 : i64} {
  func.func @kernel(%arg0: i32, %arg1: memref<128x128xf32, #tpu.memory_space<vmem>>, %arg2: memref<128x8xf32, #tpu.memory_space<vmem>>, %arg3: memref<128x4xf32, #tpu.memory_space<vmem>>, %arg4: memref<112x128xf32, #tpu.memory_space<vmem>>, %arg5: memref<128x2xf32, #tpu.memory_space<vmem>>) attributes {dimension_semantics = [#tpu.dimension_semantics<arbitrary>], iteration_bounds = array<i64: 1>, scalar_prefetch = 0 : i64, scratch_operands = 0 : i64, tpu.core_type = #tpu.core_type<tc>, window_params = [{pipeline_mode = #tpu.pipeline_mode<synchronous>, transform_indices = @transform_0, window_bounds = array<i64: 128, 128>}, {pipeline_mode = #tpu.pipeline_mode<synchronous>, transform_indices = @transform_1, window_bounds = array<i64: 128, 8>}, {pipeline_mode = #tpu.pipeline_mode<synchronous>, transform_indices = @transform_2, window_bounds = array<i64: 128, 4>}, {pipeline_mode = #tpu.pipeline_mode<synchronous>, transform_indices = @transform_3, window_bounds = array<i64: 112, 128>}, {pipeline_mode = #tpu.pipeline_mode<synchronous>, transform_indices = @transform_4, window_bounds = array<i64: 128, 2>}]} {
    %c0 = arith.constant 0 : index
    %c0_0 = arith.constant 0 : index
    %0 = vector.load %arg1[%c0, %c0_0] : memref<128x128xf32, #tpu.memory_space<vmem>>, vector<128x128xf32>
    %c0_1 = arith.constant 0 : index
    %c0_2 = arith.constant 0 : index
    %1 = vector.load %arg2[%c0_1, %c0_2] : memref<128x8xf32, #tpu.memory_space<vmem>>, vector<128x8xf32>
    %c0_3 = arith.constant 0 : index
    %c0_4 = arith.constant 0 : index
    %2 = vector.load %arg3[%c0_3, %c0_4] : memref<128x4xf32, #tpu.memory_space<vmem>>, vector<128x4xf32>
    %c0_5 = arith.constant 0 : index
    %c0_6 = arith.constant 0 : index
    %3 = vector.load %arg4[%c0_5, %c0_6] : memref<112x128xf32, #tpu.memory_space<vmem>>, vector<8x32xf32>
    %cst = arith.constant dense<0.000000e+00> : vector<128x32xf32>
    %4 = tpu.matmul %1, %3, %cst {dimension_numbers = #tpu.dot_dimension_numbers<[1], [0], [0], [1], [0, 0, 1, 1], [], []>} : vector<128x8xf32>, vector<8x32xf32>, vector<128x32xf32> -> vector<128x32xf32>
    %cst_7 = arith.constant dense<0.000000e+00> : vector<128x32xf32>
    %5 = tpu.matmul %0, %4, %cst_7 {dimension_numbers = #tpu.dot_dimension_numbers<[1], [0], [0], [1], [0, 0, 1, 1], [], []>} : vector<128x128xf32>, vector<128x32xf32>, vector<128x32xf32> -> vector<128x32xf32>
    %c104 = arith.constant 104 : index
    %c0_8 = arith.constant 0 : index
    %6 = vector.load %arg4[%c104, %c0_8] : memref<112x128xf32, #tpu.memory_space<vmem>>, vector<1x32xf32>
    %7 = vector.broadcast %6 : vector<1x32xf32> to vector<128x32xf32>
    %8 = arith.addf %5, %7 : vector<128x32xf32>
    %cst_9 = arith.constant 0.000000e+00 : f32
    %9 = vector.broadcast %cst_9 : f32 to vector<128x32xf32>
    %10 = arith.maximumf %8, %9 : vector<128x32xf32>
    %c8 = arith.constant 8 : index
    %c0_10 = arith.constant 0 : index
    %11 = vector.load %arg4[%c8, %c0_10] : memref<112x128xf32, #tpu.memory_space<vmem>>, vector<32x16xf32>
    %cst_11 = arith.constant dense<0.000000e+00> : vector<128x16xf32>
    %12 = tpu.matmul %10, %11, %cst_11 {dimension_numbers = #tpu.dot_dimension_numbers<[1], [0], [0], [1], [0, 0, 1, 1], [], []>} : vector<128x32xf32>, vector<32x16xf32>, vector<128x16xf32> -> vector<128x16xf32>
    %cst_12 = arith.constant dense<0.000000e+00> : vector<128x16xf32>
    %13 = tpu.matmul %0, %12, %cst_12 {dimension_numbers = #tpu.dot_dimension_numbers<[1], [0], [0], [1], [0, 0, 1, 1], [], []>} : vector<128x128xf32>, vector<128x16xf32>, vector<128x16xf32> -> vector<128x16xf32>
    %c105 = arith.constant 105 : index
    %c0_13 = arith.constant 0 : index
    %14 = vector.load %arg4[%c105, %c0_13] : memref<112x128xf32, #tpu.memory_space<vmem>>, vector<1x16xf32>
    %15 = vector.broadcast %14 : vector<1x16xf32> to vector<128x16xf32>
    %16 = arith.addf %13, %15 : vector<128x16xf32>
    %c40 = arith.constant 40 : index
    %c0_14 = arith.constant 0 : index
    %17 = vector.load %arg4[%c40, %c0_14] : memref<112x128xf32, #tpu.memory_space<vmem>>, vector<4x32xf32>
    %cst_15 = arith.constant dense<0.000000e+00> : vector<128x32xf32>
    %18 = tpu.matmul %2, %17, %cst_15 {dimension_numbers = #tpu.dot_dimension_numbers<[1], [0], [0], [1], [0, 0, 1, 1], [], []>} : vector<128x4xf32>, vector<4x32xf32>, vector<128x32xf32> -> vector<128x32xf32>
    %c106 = arith.constant 106 : index
    %c0_16 = arith.constant 0 : index
    %19 = vector.load %arg4[%c106, %c0_16] : memref<112x128xf32, #tpu.memory_space<vmem>>, vector<1x32xf32>
    %20 = vector.broadcast %19 : vector<1x32xf32> to vector<128x32xf32>
    %21 = arith.addf %18, %20 : vector<128x32xf32>
    %cst_17 = arith.constant 0.000000e+00 : f32
    %22 = vector.broadcast %cst_17 : f32 to vector<128x32xf32>
    %23 = arith.maximumf %21, %22 : vector<128x32xf32>
    %c48 = arith.constant 48 : index
    %c0_18 = arith.constant 0 : index
    %24 = vector.load %arg4[%c48, %c0_18] : memref<112x128xf32, #tpu.memory_space<vmem>>, vector<32x4xf32>
    %cst_19 = arith.constant dense<0.000000e+00> : vector<128x4xf32>
    %25 = tpu.matmul %23, %24, %cst_19 {dimension_numbers = #tpu.dot_dimension_numbers<[1], [0], [0], [1], [0, 0, 1, 1], [], []>} : vector<128x32xf32>, vector<32x4xf32>, vector<128x4xf32> -> vector<128x4xf32>
    %c107 = arith.constant 107 : index
    %c0_20 = arith.constant 0 : index
    %26 = vector.load %arg4[%c107, %c0_20] : memref<112x128xf32, #tpu.memory_space<vmem>>, vector<1x4xf32>
    %27 = vector.broadcast %26 : vector<1x4xf32> to vector<128x4xf32>
    %28 = arith.addf %25, %27 : vector<128x4xf32>
    %cst_21 = arith.constant 0.000000e+00 : f32
    %29 = vector.broadcast %cst_21 : f32 to vector<128x4xf32>
    %30 = arith.maximumf %28, %29 : vector<128x4xf32>
    %c80 = arith.constant 80 : index
    %c0_22 = arith.constant 0 : index
    %31 = vector.load %arg4[%c80, %c0_22] : memref<112x128xf32, #tpu.memory_space<vmem>>, vector<16x2xf32>
    %cst_23 = arith.constant dense<0.000000e+00> : vector<128x2xf32>
    %32 = tpu.matmul %16, %31, %cst_23 {dimension_numbers = #tpu.dot_dimension_numbers<[1], [0], [0], [1], [0, 0, 1, 1], [], []>} : vector<128x16xf32>, vector<16x2xf32>, vector<128x2xf32> -> vector<128x2xf32>
    %c96 = arith.constant 96 : index
    %c0_24 = arith.constant 0 : index
    %33 = vector.load %arg4[%c96, %c0_24] : memref<112x128xf32, #tpu.memory_space<vmem>>, vector<4x2xf32>
    %cst_25 = arith.constant dense<0.000000e+00> : vector<128x2xf32>
    %34 = tpu.matmul %30, %33, %cst_25 {dimension_numbers = #tpu.dot_dimension_numbers<[1], [0], [0], [1], [0, 0, 1, 1], [], []>} : vector<128x4xf32>, vector<4x2xf32>, vector<128x2xf32> -> vector<128x2xf32>
    %35 = arith.addf %32, %34 : vector<128x2xf32>
    %c108 = arith.constant 108 : index
    %c0_26 = arith.constant 0 : index
    %36 = vector.load %arg4[%c108, %c0_26] : memref<112x128xf32, #tpu.memory_space<vmem>>, vector<1x2xf32>
    %37 = vector.broadcast %36 : vector<1x2xf32> to vector<128x2xf32>
    %38 = arith.addf %35, %37 : vector<128x2xf32>
    %cst_27 = arith.constant dense<0xFF800000> : vector<128xf32>
    %39 = vector.multi_reduction <maximumf>, %38, %cst_27 [1] : vector<128x2xf32> to vector<128xf32>
    %40 = vector.shape_cast %39 : vector<128xf32> to vector<128x1xf32>
    %41 = vector.broadcast %40 : vector<128x1xf32> to vector<128x2xf32>
    %42 = arith.subf %38, %41 : vector<128x2xf32>
    %43 = math.exp %42 : vector<128x2xf32>
    %cst_28 = arith.constant dense<0.000000e+00> : vector<128xf32>
    %44 = vector.multi_reduction <add>, %43, %cst_28 [1] : vector<128x2xf32> to vector<128xf32>
    %45 = vector.shape_cast %44 : vector<128xf32> to vector<128x1xf32>
    %46 = tpu.reciprocal %45 : vector<128x1xf32> -> vector<128x1xf32>
    %47 = vector.broadcast %46 : vector<128x1xf32> to vector<128x2xf32>
    %48 = arith.mulf %43, %47 : vector<128x2xf32>
    %c0_29 = arith.constant 0 : index
    %c0_30 = arith.constant 0 : index
    %49 = vector.load %arg5[%c0_29, %c0_30] : memref<128x2xf32, #tpu.memory_space<vmem>>, vector<128x2xf32>
    tpu.vector_store %arg5[%c0_29, %c0_30], %48 {strides = array<i32>} : memref<128x2xf32, #tpu.memory_space<vmem>>, vector<128x2xf32>,
    return
  }
  func.func @transform_0(%arg0: i32) -> (i32, i32) {
    %c0_i32 = arith.constant 0 : i32
    %c0_i32_0 = arith.constant 0 : i32
    %c0_i32_1 = arith.constant 0 : i32
    return %c0_i32, %c0_i32_0 : i32, i32
  }
  func.func @transform_1(%arg0: i32) -> (i32, i32) {
    %c0_i32 = arith.constant 0 : i32
    %c0_i32_0 = arith.constant 0 : i32
    %c0_i32_1 = arith.constant 0 : i32
    return %c0_i32, %c0_i32_0 : i32, i32
  }
  func.func @transform_2(%arg0: i32) -> (i32, i32) {
    %c0_i32 = arith.constant 0 : i32
    %c0_i32_0 = arith.constant 0 : i32
    %c0_i32_1 = arith.constant 0 : i32
    return %c0_i32, %c0_i32_0 : i32, i32
  }
  func.func @transform_3(%arg0: i32) -> (i32, i32) {
    %c0_i32 = arith.constant 0 : i32
    %c0_i32_0 = arith.constant 0 : i32
    %c0_i32_1 = arith.constant 0 : i32
    return %c0_i32, %c0_i32_0 : i32, i32
  }
  func.func @transform_4(%arg0: i32) -> (i32, i32) {
    %c0_i32 = arith.constant 0 : i32
    %c0_i32_0 = arith.constant 0 : i32
    %c0_i32_1 = arith.constant 0 : i32
    return %c0_i32, %c0_i32_0 : i32, i32
  }
}

</mosaic_0001>

<llo_original>
// kernel: gcn_forward.1
$region0: #{gcn_forward.1}
  #allocation0 [shape = 'u32[]', space=smem, size = 0x4, offset = 0x4, fixed_abs, tag = 'smem constant byte address 0x4 - core index']
  #allocation1 [shape = 'u32[72,128]{1,0:T(1,128)}', space=vmem, size = 0x9000, scoped, tag = 'internal scratch']
  %s0 = inlined_call_operand.vmem [shape: f32[128,128], index: 0, kind: input, shape index: {}]
  %s1 = inlined_call_operand.vmem [shape: f32[128,8], index: 1, kind: input, shape index: {}]
  %s2 = inlined_call_operand.vmem [shape: f32[128,4], index: 2, kind: input, shape index: {}]
  %s3 = inlined_call_operand.vmem [shape: f32[112,128], index: 3, kind: input, shape index: {}]
  %s4 = inlined_call_operand.vmem [shape: f32[128,2], index: 4, kind: output, shape index: {}]
  %s5 = sld [smem:[#allocation0]]
  $region26: #{gcn_forward.1} parent=0
    _
  %s7 = ssub.s32 1, %s5
  %s8 = scalar_select 0, %s7, %s5
  // Predicated region
  $region2: #{gcn_forward.1} parent=0 // pred_check
    _
  $region3: #{gcn_forward.1} parent=0 // pred_check_branch
    %10 = sbr.rel (0) target = $region5
  $region4: #{gcn_forward.1} parent=0 // pred_region
    _
  $region5: #{gcn_forward.1} parent=0 // pred_fallthru
    _
  // Predicated region
  $region6: #{gcn_forward.1} parent=0 // pred_check
    _
  $region7: #{gcn_forward.1} parent=0 // pred_check_branch
    %12 = sbr.rel (0) target = $region9
  $region8: #{gcn_forward.1} parent=0 // pred_region
    _
  $region9: #{gcn_forward.1} parent=0 // pred_fallthru
    _
  // Predicated region
  $region10: #{gcn_forward.1} parent=0 // pred_check
    _
  $region11: #{gcn_forward.1} parent=0 // pred_check_branch
    %14 = sbr.rel (0) target = $region13
  $region12: #{gcn_forward.1} parent=0 // pred_region
    _
  $region13: #{gcn_forward.1} parent=0 // pred_fallthru
    _
  // Predicated region
  $region14: #{gcn_forward.1} parent=0 // pred_check
    _
  $region15: #{gcn_forward.1} parent=0 // pred_check_branch
    %16 = sbr.rel (0) target = $region17
  $region16: #{gcn_forward.1} parent=0 // pred_region
    _
  $region17: #{gcn_forward.1} parent=0 // pred_fallthru
    _
  %v17 = vld [vmem:[%s0] sm:$0xff]
  %v18 = vld [vmem:[%s0 + $0x8] sm:$0xff]
  %v19 = vld [vmem:[%s0 + $0x10] sm:$0xff]
  %v20 = vld [vmem:[%s0 + $0x18] sm:$0xff]
  %v21 = vld [vmem:[%s0 + $0x20] sm:$0xff]
  %v22 = vld [vmem:[%s0 + $0x28] sm:$0xff]
  %v23 = vld [vmem:[%s0 + $0x30] sm:$0xff]
  %v24 = vld [vmem:[%s0 + $0x38] sm:$0xff]
  %v25 = vld [vmem:[%s0 + $0x40] sm:$0xff]
  %v26 = vld [vmem:[%s0 + $0x48] sm:$0xff]
  %v27 = vld [vmem:[%s0 + $0x50] sm:$0xff]
  %v28 = vld [vmem:[%s0 + $0x58] sm:$0xff]
  %v29 = vld [vmem:[%s0 + $0x60] sm:$0xff]
  %v30 = vld [vmem:[%s0 + $0x68] sm:$0xff]
  %v31 = vld [vmem:[%s0 + $0x70] sm:$0xff]
  %v32 = vld [vmem:[%s0 + $0x78] sm:$0xff]
  %v33 = vld [vmem:[%s1] sm:$0xff]
  %v34 = vld [vmem:[%s1 + $0x8] sm:$0xff]
  %v35 = vld [vmem:[%s1 + $0x10] sm:$0xff]
  %v36 = vld [vmem:[%s1 + $0x18] sm:$0xff]
  %v37 = vld [vmem:[%s1 + $0x20] sm:$0xff]
  %v38 = vld [vmem:[%s1 + $0x28] sm:$0xff]
  %v39 = vld [vmem:[%s1 + $0x30] sm:$0xff]
  %v40 = vld [vmem:[%s1 + $0x38] sm:$0xff]
  %v41 = vld [vmem:[%s1 + $0x40] sm:$0xff]
  %v42 = vld [vmem:[%s1 + $0x48] sm:$0xff]
  %v43 = vld [vmem:[%s1 + $0x50] sm:$0xff]
  %v44 = vld [vmem:[%s1 + $0x58] sm:$0xff]
  %v45 = vld [vmem:[%s1 + $0x60] sm:$0xff]
  %v46 = vld [vmem:[%s1 + $0x68] sm:$0xff]
  %v47 = vld [vmem:[%s1 + $0x70] sm:$0xff]
  %v48 = vld [vmem:[%s1 + $0x78] sm:$0xff]
  %v49 = vld [vmem:[%s2] sm:$0xff]
  %v50 = vld [vmem:[%s2 + $0x8] sm:$0xff]
  %v51 = vld [vmem:[%s2 + $0x10] sm:$0xff]
  %v52 = vld [vmem:[%s2 + $0x18] sm:$0xff]
  %v53 = vld [vmem:[%s2 + $0x20] sm:$0xff]
  %v54 = vld [vmem:[%s2 + $0x28] sm:$0xff]
  %v55 = vld [vmem:[%s2 + $0x30] sm:$0xff]
  %v56 = vld [vmem:[%s2 + $0x38] sm:$0xff]
  %v57 = vld [vmem:[%s2 + $0x40] sm:$0xff]
  %v58 = vld [vmem:[%s2 + $0x48] sm:$0xff]
  %v59 = vld [vmem:[%s2 + $0x50] sm:$0xff]
  %v60 = vld [vmem:[%s2 + $0x58] sm:$0xff]
  %v61 = vld [vmem:[%s2 + $0x60] sm:$0xff]
  %v62 = vld [vmem:[%s2 + $0x68] sm:$0xff]
  %v63 = vld [vmem:[%s2 + $0x70] sm:$0xff]
  %v64 = vld [vmem:[%s2 + $0x78] sm:$0xff]
  %v65 = vld [vmem:[%s3] sm:$0xff]
  %vm66 = vcmask 64512
  %v68 = vsel %vm66, %v33, 0
  %v71 = vsel %vm66, %v34, 0
  %v74 = vsel %vm66, %v35, 0
  %v77 = vsel %vm66, %v36, 0
  %v80 = vsel %vm66, %v37, 0
  %v83 = vsel %vm66, %v38, 0
  %v86 = vsel %vm66, %v39, 0
  %v89 = vsel %vm66, %v40, 0
  %v92 = vsel %vm66, %v41, 0
  %v95 = vsel %vm66, %v42, 0
  %v98 = vsel %vm66, %v43, 0
  %v101 = vsel %vm66, %v44, 0
  %v104 = vsel %vm66, %v45, 0
  %v107 = vsel %vm66, %v46, 0
  %v110 = vsel %vm66, %v47, 0
  %v113 = vsel %vm66, %v48, 0
  %115 = vmatpush.msra.mxu0 0.0
  %116 = vmatpush.msra.mxu0 0.0
  %117 = vmatpush.msra.mxu0 0.0
  %118 = vmatpush.msra.mxu0 0.0
  %119 = vmatpush.msra.mxu0 0.0
  %120 = vmatpush.msra.mxu0 0.0
  %121 = vmatpush.msra.mxu0 0.0
  %122 = vmatpush.msra.mxu0 0.0
  %123 = vmatpush.msra.mxu0 0.0
  %124 = vmatpush.msra.mxu0 0.0
  %125 = vmatpush.msra.mxu0 0.0
  %126 = vmatpush.msra.mxu0 0.0
  %127 = vmatpush.msra.mxu0 0.0
  %128 = vmatpush.msra.mxu0 0.0
  %129 = vmatpush.msra.mxu0 0.0
  %130 = vmatpush.msra.mxu0 %v65
  %131 = vmatmul.f32.gmra.mxu0 %v68
  %v132 = vpop.f32.mrf.mxu0
  %v133 = vadd.f32 0.0, %v132
  %134 = vmatmul.f32.gmra.mxu0 %v71
  %v135 = vpop.f32.mrf.mxu0
  %v136 = vadd.f32 0.0, %v135
  %137 = vmatmul.f32.gmra.mxu0 %v74
  %v138 = vpop.f32.mrf.mxu0
  %v139 = vadd.f32 0.0, %v138
  %140 = vmatmul.f32.gmra.mxu0 %v77
  %v141 = vpop.f32.mrf.mxu0
  %v142 = vadd.f32 0.0, %v141
  %143 = vmatmul.f32.gmra.mxu0 %v80
  %v144 = vpop.f32.mrf.mxu0
  %v145 = vadd.f32 0.0, %v144
  %146 = vmatmul.f32.gmra.mxu0 %v83
  %v147 = vpop.f32.mrf.mxu0
  %v148 = vadd.f32 0.0, %v147
  %149 = vmatmul.f32.gmra.mxu0 %v86
  %v150 = vpop.f32.mrf.mxu0
  %v151 = vadd.f32 0.0, %v150
  %152 = vmatmul.f32.gmra.mxu0 %v89
  %v153 = vpop.f32.mrf.mxu0
  %v154 = vadd.f32 0.0, %v153
  %155 = vmatmul.f32.gmra.mxu0 %v92
  %v156 = vpop.f32.mrf.mxu0
  %v157 = vadd.f32 0.0, %v156
  %158 = vmatmul.f32.gmra.mxu0 %v95
  %v159 = vpop.f32.mrf.mxu0
  %v160 = vadd.f32 0.0, %v159
  %161 = vmatmul.f32.gmra.mxu0 %v98
  %v162 = vpop.f32.mrf.mxu0
  %v163 = vadd.f32 0.0, %v162
  %164 = vmatmul.f32.gmra.mxu0 %v101
  %v165 = vpop.f32.mrf.mxu0
  %v166 = vadd.f32 0.0, %v165
  %167 = vmatmul.f32.gmra.mxu0 %v104
  %v168 = vpop.f32.mrf.mxu0
  %v169 = vadd.f32 0.0, %v168
  %170 = vmatmul.f32.gmra.mxu0 %v107
  %v171 = vpop.f32.mrf.mxu0
  %v172 = vadd.f32 0.0, %v171
  %173 = vmatmul.f32.gmra.mxu0 %v110
  %v174 = vpop.f32.mrf.mxu0
  %v175 = vadd.f32 0.0, %v174
  %176 = vmatmul.f32.gmra.mxu0 %v113
  %v177 = vpop.f32.mrf.mxu0
  %v178 = vadd.f32 0.0, %v177
  %179 = vdwg.mxu0
  %v180 = vld [vmem:[%s3 + $0x68] sm:$0x1]
  %v181 = vperm.slane %v180, 0
  %182 = vmatpush.msra.mxu0 %v178
  %183 = vmatpush.msra.mxu0 %v175
  %184 = vmatpush.msra.mxu0 %v172
  %185 = vmatpush.msra.mxu0 %v169
  %186 = vmatpush.msra.mxu0 %v166
  %187 = vmatpush.msra.mxu0 %v163
  %188 = vmatpush.msra.mxu0 %v160
  %189 = vmatpush.msra.mxu0 %v157
  %190 = vmatpush.msra.mxu0 %v154
  %191 = vmatpush.msra.mxu0 %v151
  %192 = vmatpush.msra.mxu0 %v148
  %193 = vmatpush.msra.mxu0 %v145
  %194 = vmatpush.msra.mxu0 %v142
  %195 = vmatpush.msra.mxu0 %v139
  %196 = vmatpush.msra.mxu0 %v136
  %197 = vmatpush.msra.mxu0 %v133
  %198 = vmatmul.f32.gmra.mxu0 %v17
  %v199 = vpop.f32.mrf.mxu0
  %v200 = vadd.f32 %v181, %v199
  %201 = vmatmul.f32.gmra.mxu0 %v18
  %v202 = vpop.f32.mrf.mxu0
  %v203 = vadd.f32 %v181, %v202
  %204 = vmatmul.f32.gmra.mxu0 %v19
  %v205 = vpop.f32.mrf.mxu0
  %v206 = vadd.f32 %v181, %v205
  %207 = vmatmul.f32.gmra.mxu0 %v20
  %v208 = vpop.f32.mrf.mxu0
  %v209 = vadd.f32 %v181, %v208
  %210 = vmatmul.f32.gmra.mxu0 %v21
  %v211 = vpop.f32.mrf.mxu0
  %v212 = vadd.f32 %v181, %v211
  %213 = vmatmul.f32.gmra.mxu0 %v22
  %v214 = vpop.f32.mrf.mxu0
  %v215 = vadd.f32 %v181, %v214
  %216 = vmatmul.f32.gmra.mxu0 %v23
  %v217 = vpop.f32.mrf.mxu0
  %v218 = vadd.f32 %v181, %v217
  %219 = vmatmul.f32.gmra.mxu0 %v24
  %v220 = vpop.f32.mrf.mxu0
  %v221 = vadd.f32 %v181, %v220
  %222 = vmatmul.f32.gmra.mxu0 %v25
  %v223 = vpop.f32.mrf.mxu0
  %v224 = vadd.f32 %v181, %v223
  %225 = vmatmul.f32.gmra.mxu0 %v26
  %v226 = vpop.f32.mrf.mxu0
  %v227 = vadd.f32 %v181, %v226
  %228 = vmatmul.f32.gmra.mxu0 %v27
  %v229 = vpop.f32.mrf.mxu0
  %v230 = vadd.f32 %v181, %v229
  %231 = vmatmul.f32.gmra.mxu0 %v28
  %v232 = vpop.f32.mrf.mxu0
  %v233 = vadd.f32 %v181, %v232
  %234 = vmatmul.f32.gmra.mxu0 %v29
  %v235 = vpop.f32.mrf.mxu0
  %v236 = vadd.f32 %v181, %v235
  %237 = vmatmul.f32.gmra.mxu0 %v30
  %v238 = vpop.f32.mrf.mxu0
  %v239 = vadd.f32 %v181, %v238
  %240 = vmatmul.f32.gmra.mxu0 %v31
  %v241 = vpop.f32.mrf.mxu0
  %v242 = vadd.f32 %v181, %v241
  %243 = vmatmul.f32.gmra.mxu0 %v32
  %v244 = vpop.f32.mrf.mxu0
  %v245 = vadd.f32 %v181, %v244
  %246 = vdwg.mxu0
  %v247 = vmax.f32 %v200, 0.0
  %v248 = vmax.f32 %v203, 0.0
  %v249 = vmax.f32 %v206, 0.0
  %v250 = vmax.f32 %v209, 0.0
  %v251 = vmax.f32 %v212, 0.0
  %v252 = vmax.f32 %v215, 0.0
  %v253 = vmax.f32 %v218, 0.0
  %v254 = vmax.f32 %v221, 0.0
  %v255 = vmax.f32 %v224, 0.0
  %v256 = vmax.f32 %v227, 0.0
  %v257 = vmax.f32 %v230, 0.0
  %v258 = vmax.f32 %v233, 0.0
  %v259 = vmax.f32 %v236, 0.0
  %v260 = vmax.f32 %v239, 0.0
  %v261 = vmax.f32 %v242, 0.0
  %v262 = vmax.f32 %v245, 0.0
  %v263 = vld [vmem:[%s3 + $0x8] sm:$0xff]
  %v264 = vld [vmem:[%s3 + $0x10] sm:$0xff]
  %v265 = vld [vmem:[%s3 + $0x18] sm:$0xff]
  %v266 = vld [vmem:[%s3 + $0x20] sm:$0xff]
  %vm267 = vcmask 261120
  %v269 = vsel %vm267, %v247, 0
  %v272 = vsel %vm267, %v248, 0
  %v275 = vsel %vm267, %v249, 0
  %v278 = vsel %vm267, %v250, 0
  %v281 = vsel %vm267, %v251, 0
  %v284 = vsel %vm267, %v252, 0
  %v287 = vsel %vm267, %v253, 0
  %v290 = vsel %vm267, %v254, 0
  %v293 = vsel %vm267, %v255, 0
  %v296 = vsel %vm267, %v256, 0
  %v299 = vsel %vm267, %v257, 0
  %v302 = vsel %vm267, %v258, 0
  %v305 = vsel %vm267, %v259, 0
  %v308 = vsel %vm267, %v260, 0
  %v311 = vsel %vm267, %v261, 0
  %v314 = vsel %vm267, %v262, 0
  %316 = vmatpush.msra.mxu0 0.0
  %317 = vmatpush.msra.mxu0 0.0
  %318 = vmatpush.msra.mxu0 0.0
  %319 = vmatpush.msra.mxu0 0.0
  %320 = vmatpush.msra.mxu0 0.0
  %321 = vmatpush.msra.mxu0 0.0
  %322 = vmatpush.msra.mxu0 0.0
  %323 = vmatpush.msra.mxu0 0.0
  %324 = vmatpush.msra.mxu0 0.0
  %325 = vmatpush.msra.mxu0 0.0
  %326 = vmatpush.msra.mxu0 0.0
  %327 = vmatpush.msra.mxu0 0.0
  %328 = vmatpush.msra.mxu0 %v266
  %329 = vmatpush.msra.mxu0 %v265
  %330 = vmatpush.msra.mxu0 %v264
  %331 = vmatpush.msra.mxu0 %v263
  %332 = vmatmul.f32.gmra.mxu0 %v269
  %v333 = vpop.f32.mrf.mxu0
  %v334 = vadd.f32 0.0, %v333
  %335 = vmatmul.f32.gmra.mxu0 %v272
  %v336 = vpop.f32.mrf.mxu0
  %v337 = vadd.f32 0.0, %v336
  %338 = vmatmul.f32.gmra.mxu0 %v275
  %v339 = vpop.f32.mrf.mxu0
  %v340 = vadd.f32 0.0, %v339
  %341 = vmatmul.f32.gmra.mxu0 %v278
  %v342 = vpop.f32.mrf.mxu0
  %v343 = vadd.f32 0.0, %v342
  %344 = vmatmul.f32.gmra.mxu0 %v281
  %v345 = vpop.f32.mrf.mxu0
  %v346 = vadd.f32 0.0, %v345
  %347 = vmatmul.f32.gmra.mxu0 %v284
  %v348 = vpop.f32.mrf.mxu0
  %v349 = vadd.f32 0.0, %v348
  %350 = vmatmul.f32.gmra.mxu0 %v287
  %v351 = vpop.f32.mrf.mxu0
  %v352 = vadd.f32 0.0, %v351
  %353 = vmatmul.f32.gmra.mxu0 %v290
  %v354 = vpop.f32.mrf.mxu0
  %v355 = vadd.f32 0.0, %v354
  %356 = vmatmul.f32.gmra.mxu0 %v293
  %v357 = vpop.f32.mrf.mxu0
  %v358 = vadd.f32 0.0, %v357
  %359 = vmatmul.f32.gmra.mxu0 %v296
  %v360 = vpop.f32.mrf.mxu0
  %v361 = vadd.f32 0.0, %v360
  %362 = vmatmul.f32.gmra.mxu0 %v299
  %v363 = vpop.f32.mrf.mxu0
  %v364 = vadd.f32 0.0, %v363
  %365 = vmatmul.f32.gmra.mxu0 %v302
  %v366 = vpop.f32.mrf.mxu0
  %v367 = vadd.f32 0.0, %v366
  %368 = vmatmul.f32.gmra.mxu0 %v305
  %v369 = vpop.f32.mrf.mxu0
  %v370 = vadd.f32 0.0, %v369
  %371 = vmatmul.f32.gmra.mxu0 %v308
  %v372 = vpop.f32.mrf.mxu0
  %v373 = vadd.f32 0.0, %v372
  %374 = vmatmul.f32.gmra.mxu0 %v311
  %v375 = vpop.f32.mrf.mxu0
  %v376 = vadd.f32 0.0, %v375
  %377 = vmatmul.f32.gmra.mxu0 %v314
  %v378 = vpop.f32.mrf.mxu0
  %v379 = vadd.f32 0.0, %v378
  %380 = vdwg.mxu0
  %v381 = vld [vmem:[%s3 + $0x69] sm:$0x1]
  %v382 = vperm.slane %v381, 0
  %383 = vmatpush.msra.mxu0 %v379
  %384 = vmatpush.msra.mxu0 %v376
  %385 = vmatpush.msra.mxu0 %v373
  %386 = vmatpush.msra.mxu0 %v370
  %387 = vmatpush.msra.mxu0 %v367
  %388 = vmatpush.msra.mxu0 %v364
  %389 = vmatpush.msra.mxu0 %v361
  %390 = vmatpush.msra.mxu0 %v358
  %391 = vmatpush.msra.mxu0 %v355
  %392 = vmatpush.msra.mxu0 %v352
  %393 = vmatpush.msra.mxu0 %v349
  %394 = vmatpush.msra.mxu0 %v346
  %395 = vmatpush.msra.mxu0 %v343
  %396 = vmatpush.msra.mxu0 %v340
  %397 = vmatpush.msra.mxu0 %v337
  %398 = vmatpush.msra.mxu0 %v334
  %399 = vmatmul.f32.gmra.mxu0 %v17
  %v400 = vpop.f32.mrf.mxu0
  %v401 = vadd.f32 %v382, %v400
  %402 = vmatmul.f32.gmra.mxu0 %v18
  %v403 = vpop.f32.mrf.mxu0
  %v404 = vadd.f32 %v382, %v403
  %405 = vmatmul.f32.gmra.mxu0 %v19
  %v406 = vpop.f32.mrf.mxu0
  %v407 = vadd.f32 %v382, %v406
  %408 = vmatmul.f32.gmra.mxu0 %v20
  %v409 = vpop.f32.mrf.mxu0
  %v410 = vadd.f32 %v382, %v409
  %411 = vmatmul.f32.gmra.mxu0 %v21
  %v412 = vpop.f32.mrf.mxu0
  %v413 = vadd.f32 %v382, %v412
  %414 = vmatmul.f32.gmra.mxu0 %v22
  %v415 = vpop.f32.mrf.mxu0
  %v416 = vadd.f32 %v382, %v415
  %417 = vmatmul.f32.gmra.mxu0 %v23
  %v418 = vpop.f32.mrf.mxu0
  %v419 = vadd.f32 %v382, %v418
  %420 = vmatmul.f32.gmra.mxu0 %v24
  %v421 = vpop.f32.mrf.mxu0
  %v422 = vadd.f32 %v382, %v421
  %423 = vmatmul.f32.gmra.mxu0 %v25
  %v424 = vpop.f32.mrf.mxu0
  %v425 = vadd.f32 %v382, %v424
  %426 = vmatmul.f32.gmra.mxu0 %v26
  %v427 = vpop.f32.mrf.mxu0
  %v428 = vadd.f32 %v382, %v427
  %429 = vmatmul.f32.gmra.mxu0 %v27
  %v430 = vpop.f32.mrf.mxu0
  %v431 = vadd.f32 %v382, %v430
  %432 = vmatmul.f32.gmra.mxu0 %v28
  %v433 = vpop.f32.mrf.mxu0
  %v434 = vadd.f32 %v382, %v433
  %435 = vmatmul.f32.gmra.mxu0 %v29
  %v436 = vpop.f32.mrf.mxu0
  %v437 = vadd.f32 %v382, %v436
  %438 = vmatmul.f32.gmra.mxu0 %v30
  %v439 = vpop.f32.mrf.mxu0
  %v440 = vadd.f32 %v382, %v439
  %441 = vmatmul.f32.gmra.mxu0 %v31
  %v442 = vpop.f32.mrf.mxu0
  %v443 = vadd.f32 %v382, %v442
  %444 = vmatmul.f32.gmra.mxu0 %v32
  %v445 = vpop.f32.mrf.mxu0
  %v446 = vadd.f32 %v382, %v445
  %447 = vdwg.mxu0
  %v448 = vld [vmem:[%s3 + $0x28] sm:$0xf]
  %v449 = vld [vmem:[%s3 + $0x6a] sm:$0x1]
  %v450 = vperm.slane %v449, 0
  %vm451 = vcmask 31744
  %v453 = vsel %vm451, %v49, 0
  %v456 = vsel %vm451, %v50, 0
  %v459 = vsel %vm451, %v51, 0
  %v462 = vsel %vm451, %v52, 0
  %v465 = vsel %vm451, %v53, 0
  %v468 = vsel %vm451, %v54, 0
  %v471 = vsel %vm451, %v55, 0
  %v474 = vsel %vm451, %v56, 0
  %v477 = vsel %vm451, %v57, 0
  %v480 = vsel %vm451, %v58, 0
  %v483 = vsel %vm451, %v59, 0
  %v486 = vsel %vm451, %v60, 0
  %v489 = vsel %vm451, %v61, 0
  %v492 = vsel %vm451, %v62, 0
  %v495 = vsel %vm451, %v63, 0
  %v498 = vsel %vm451, %v64, 0
  %vm500 = vcmask 1043456
  %v502 = vsel %vm500, %v448, 0
  %504 = vmatpush.msra.mxu0 0.0
  %505 = vmatpush.msra.mxu0 0.0
  %506 = vmatpush.msra.mxu0 0.0
  %507 = vmatpush.msra.mxu0 0.0
  %508 = vmatpush.msra.mxu0 0.0
  %509 = vmatpush.msra.mxu0 0.0
  %510 = vmatpush.msra.mxu0 0.0
  %511 = vmatpush.msra.mxu0 0.0
  %512 = vmatpush.msra.mxu0 0.0
  %513 = vmatpush.msra.mxu0 0.0
  %514 = vmatpush.msra.mxu0 0.0
  %515 = vmatpush.msra.mxu0 0.0
  %516 = vmatpush.msra.mxu0 0.0
  %517 = vmatpush.msra.mxu0 0.0
  %518 = vmatpush.msra.mxu0 0.0
  %519 = vmatpush.msra.mxu0 %v502
  %520 = vmatmul.f32.gmra.mxu0 %v453
  %v521 = vpop.f32.mrf.mxu0
  %v522 = vadd.f32 %v450, %v521
  %523 = vmatmul.f32.gmra.mxu0 %v456
  %v524 = vpop.f32.mrf.mxu0
  %v525 = vadd.f32 %v450, %v524
  %526 = vmatmul.f32.gmra.mxu0 %v459
  %v527 = vpop.f32.mrf.mxu0
  %v528 = vadd.f32 %v450, %v527
  %529 = vmatmul.f32.gmra.mxu0 %v462
  %v530 = vpop.f32.mrf.mxu0
  %v531 = vadd.f32 %v450, %v530
  %532 = vmatmul.f32.gmra.mxu0 %v465
  %v533 = vpop.f32.mrf.mxu0
  %v534 = vadd.f32 %v450, %v533
  %535 = vmatmul.f32.gmra.mxu0 %v468
  %v536 = vpop.f32.mrf.mxu0
  %v537 = vadd.f32 %v450, %v536
  %538 = vmatmul.f32.gmra.mxu0 %v471
  %v539 = vpop.f32.mrf.mxu0
  %v540 = vadd.f32 %v450, %v539
  %541 = vmatmul.f32.gmra.mxu0 %v474
  %v542 = vpop.f32.mrf.mxu0
  %v543 = vadd.f32 %v450, %v542
  %544 = vmatmul.f32.gmra.mxu0 %v477
  %v545 = vpop.f32.mrf.mxu0
  %v546 = vadd.f32 %v450, %v545
  %547 = vmatmul.f32.gmra.mxu0 %v480
  %v548 = vpop.f32.mrf.mxu0
  %v549 = vadd.f32 %v450, %v548
  %550 = vmatmul.f32.gmra.mxu0 %v483
  %v551 = vpop.f32.mrf.mxu0
  %v552 = vadd.f32 %v450, %v551
  %553 = vmatmul.f32.gmra.mxu0 %v486
  %v554 = vpop.f32.mrf.mxu0
  %v555 = vadd.f32 %v450, %v554
  %556 = vmatmul.f32.gmra.mxu0 %v489
  %v557 = vpop.f32.mrf.mxu0
  %v558 = vadd.f32 %v450, %v557
  %559 = vmatmul.f32.gmra.mxu0 %v492
  %v560 = vpop.f32.mrf.mxu0
  %v561 = vadd.f32 %v450, %v560
  %562 = vmatmul.f32.gmra.mxu0 %v495
  %v563 = vpop.f32.mrf.mxu0
  %v564 = vadd.f32 %v450, %v563
  %565 = vmatmul.f32.gmra.mxu0 %v498
  %v566 = vpop.f32.mrf.mxu0
  %v567 = vadd.f32 %v450, %v566
  %568 = vdwg.mxu0
  %v569 = vmax.f32 %v522, 0.0
  %v570 = vmax.f32 %v525, 0.0
  %v571 = vmax.f32 %v528, 0.0
  %v572 = vmax.f32 %v531, 0.0
  %v573 = vmax.f32 %v534, 0.0
  %v574 = vmax.f32 %v537, 0.0
  %v575 = vmax.f32 %v540, 0.0
  %v576 = vmax.f32 %v543, 0.0
  %v577 = vmax.f32 %v546, 0.0
  %v578 = vmax.f32 %v549, 0.0
  %v579 = vmax.f32 %v552, 0.0
  %v580 = vmax.f32 %v555, 0.0
  %v581 = vmax.f32 %v558, 0.0
  %v582 = vmax.f32 %v561, 0.0
  %v583 = vmax.f32 %v564, 0.0
  %v584 = vmax.f32 %v567, 0.0
  %v585 = vld [vmem:[%s3 + $0x30] sm:$0xff]
  %v586 = vld [vmem:[%s3 + $0x38] sm:$0xff]
  %v587 = vld [vmem:[%s3 + $0x40] sm:$0xff]
  %v588 = vld [vmem:[%s3 + $0x48] sm:$0xff]
  %v589 = vld [vmem:[%s3 + $0x6b] sm:$0x1]
  %v590 = vperm.slane %v589, 0
  %v592 = vsel %vm267, %v569, 0
  %v595 = vsel %vm267, %v570, 0
  %v598 = vsel %vm267, %v571, 0
  %v601 = vsel %vm267, %v572, 0
  %v604 = vsel %vm267, %v573, 0
  %v607 = vsel %vm267, %v574, 0
  %v610 = vsel %vm267, %v575, 0
  %v613 = vsel %vm267, %v576, 0
  %v616 = vsel %vm267, %v577, 0
  %v619 = vsel %vm267, %v578, 0
  %v622 = vsel %vm267, %v579, 0
  %v625 = vsel %vm267, %v580, 0
  %v628 = vsel %vm267, %v581, 0
  %v631 = vsel %vm267, %v582, 0
  %v634 = vsel %vm267, %v583, 0
  %v637 = vsel %vm267, %v584, 0
  %639 = vmatpush.msra.mxu0 0.0
  %640 = vmatpush.msra.mxu0 0.0
  %641 = vmatpush.msra.mxu0 0.0
  %642 = vmatpush.msra.mxu0 0.0
  %643 = vmatpush.msra.mxu0 0.0
  %644 = vmatpush.msra.mxu0 0.0
  %645 = vmatpush.msra.mxu0 0.0
  %646 = vmatpush.msra.mxu0 0.0
  %647 = vmatpush.msra.mxu0 0.0
  %648 = vmatpush.msra.mxu0 0.0
  %649 = vmatpush.msra.mxu0 0.0
  %650 = vmatpush.msra.mxu0 0.0
  %651 = vmatpush.msra.mxu0 %v588
  %652 = vmatpush.msra.mxu0 %v587
  %653 = vmatpush.msra.mxu0 %v586
  %654 = vmatpush.msra.mxu0 %v585
  %655 = vmatmul.f32.gmra.mxu0 %v592
  %v656 = vpop.f32.mrf.mxu0
  %v657 = vadd.f32 %v590, %v656
  %658 = vmatmul.f32.gmra.mxu0 %v595
  %v659 = vpop.f32.mrf.mxu0
  %v660 = vadd.f32 %v590, %v659
  %661 = vmatmul.f32.gmra.mxu0 %v598
  %v662 = vpop.f32.mrf.mxu0
  %v663 = vadd.f32 %v590, %v662
  %664 = vmatmul.f32.gmra.mxu0 %v601
  %v665 = vpop.f32.mrf.mxu0
  %v666 = vadd.f32 %v590, %v665
  %667 = vmatmul.f32.gmra.mxu0 %v604
  %v668 = vpop.f32.mrf.mxu0
  %v669 = vadd.f32 %v590, %v668
  %670 = vmatmul.f32.gmra.mxu0 %v607
  %v671 = vpop.f32.mrf.mxu0
  %v672 = vadd.f32 %v590, %v671
  %673 = vmatmul.f32.gmra.mxu0 %v610
  %v674 = vpop.f32.mrf.mxu0
  %v675 = vadd.f32 %v590, %v674
  %676 = vmatmul.f32.gmra.mxu0 %v613
  %v677 = vpop.f32.mrf.mxu0
  %v678 = vadd.f32 %v590, %v677
  %679 = vmatmul.f32.gmra.mxu0 %v616
  %v680 = vpop.f32.mrf.mxu0
  %v681 = vadd.f32 %v590, %v680
  %682 = vmatmul.f32.gmra.mxu0 %v619
  %v683 = vpop.f32.mrf.mxu0
  %v684 = vadd.f32 %v590, %v683
  %685 = vmatmul.f32.gmra.mxu0 %v622
  %v686 = vpop.f32.mrf.mxu0
  %v687 = vadd.f32 %v590, %v686
  %688 = vmatmul.f32.gmra.mxu0 %v625
  %v689 = vpop.f32.mrf.mxu0
  %v690 = vadd.f32 %v590, %v689
  %691 = vmatmul.f32.gmra.mxu0 %v628
  %v692 = vpop.f32.mrf.mxu0
  %v693 = vadd.f32 %v590, %v692
  %694 = vmatmul.f32.gmra.mxu0 %v631
  %v695 = vpop.f32.mrf.mxu0
  %v696 = vadd.f32 %v590, %v695
  %697 = vmatmul.f32.gmra.mxu0 %v634
  %v698 = vpop.f32.mrf.mxu0
  %v699 = vadd.f32 %v590, %v698
  %700 = vmatmul.f32.gmra.mxu0 %v637
  %v701 = vpop.f32.mrf.mxu0
  %v702 = vadd.f32 %v590, %v701
  %703 = vdwg.mxu0
  %v704 = vmax.f32 %v657, 0.0
  %v705 = vmax.f32 %v660, 0.0
  %v706 = vmax.f32 %v663, 0.0
  %v707 = vmax.f32 %v666, 0.0
  %v708 = vmax.f32 %v669, 0.0
  %v709 = vmax.f32 %v672, 0.0
  %v710 = vmax.f32 %v675, 0.0
  %v711 = vmax.f32 %v678, 0.0
  %v712 = vmax.f32 %v681, 0.0
  %v713 = vmax.f32 %v684, 0.0
  %v714 = vmax.f32 %v687, 0.0
  %v715 = vmax.f32 %v690, 0.0
  %v716 = vmax.f32 %v693, 0.0
  %v717 = vmax.f32 %v696, 0.0
  %v718 = vmax.f32 %v699, 0.0
  %v719 = vmax.f32 %v702, 0.0
  %v720 = vld [vmem:[%s3 + $0x50] sm:$0xff]
  %v721 = vld [vmem:[%s3 + $0x58] sm:$0xff]
  %v722 = vld [vmem:[%s3 + $0x60] sm:$0xf]
  %v724 = vsel %vm451, %v704, 0
  %v727 = vsel %vm451, %v705, 0
  %v730 = vsel %vm451, %v706, 0
  %v733 = vsel %vm451, %v707, 0
  %v736 = vsel %vm451, %v708, 0
  %v739 = vsel %vm451, %v709, 0
  %v742 = vsel %vm451, %v710, 0
  %v745 = vsel %vm451, %v711, 0
  %v748 = vsel %vm451, %v712, 0
  %v751 = vsel %vm451, %v713, 0
  %v754 = vsel %vm451, %v714, 0
  %v757 = vsel %vm451, %v715, 0
  %v760 = vsel %vm451, %v716, 0
  %v763 = vsel %vm451, %v717, 0
  %v766 = vsel %vm451, %v718, 0
  %v769 = vsel %vm451, %v719, 0
  %v772 = vsel %vm500, %v722, 0
  %774 = vmatpush.msra.mxu0 0.0
  %775 = vmatpush.msra.mxu0 0.0
  %776 = vmatpush.msra.mxu0 0.0
  %777 = vmatpush.msra.mxu0 0.0
  %778 = vmatpush.msra.mxu0 0.0
  %779 = vmatpush.msra.mxu0 0.0
  %780 = vmatpush.msra.mxu0 0.0
  %781 = vmatpush.msra.mxu0 0.0
  %782 = vmatpush.msra.mxu0 0.0
  %783 = vmatpush.msra.mxu0 0.0
  %784 = vmatpush.msra.mxu0 0.0
  %785 = vmatpush.msra.mxu0 0.0
  %786 = vmatpush.msra.mxu0 0.0
  %787 = vmatpush.msra.mxu0 0.0
  %788 = vmatpush.msra.mxu0 0.0
  %789 = vmatpush.msra.mxu0 %v772
  %790 = vmatmul.f32.gmra.mxu0 %v724
  %v791 = vpop.f32.mrf.mxu0
  %v792 = vadd.f32 0.0, %v791
  %793 = vmatmul.f32.gmra.mxu0 %v727
  %v794 = vpop.f32.mrf.mxu0
  %v795 = vadd.f32 0.0, %v794
  %796 = vmatmul.f32.gmra.mxu0 %v730
  %v797 = vpop.f32.mrf.mxu0
  %v798 = vadd.f32 0.0, %v797
  %799 = vmatmul.f32.gmra.mxu0 %v733
  %v800 = vpop.f32.mrf.mxu0
  %v801 = vadd.f32 0.0, %v800
  %802 = vmatmul.f32.gmra.mxu0 %v736
  %v803 = vpop.f32.mrf.mxu0
  %v804 = vadd.f32 0.0, %v803
  %805 = vmatmul.f32.gmra.mxu0 %v739
  %v806 = vpop.f32.mrf.mxu0
  %v807 = vadd.f32 0.0, %v806
  %808 = vmatmul.f32.gmra.mxu0 %v742
  %v809 = vpop.f32.mrf.mxu0
  %v810 = vadd.f32 0.0, %v809
  %811 = vmatmul.f32.gmra.mxu0 %v745
  %v812 = vpop.f32.mrf.mxu0
  %v813 = vadd.f32 0.0, %v812
  %814 = vmatmul.f32.gmra.mxu0 %v748
  %v815 = vpop.f32.mrf.mxu0
  %v816 = vadd.f32 0.0, %v815
  %817 = vmatmul.f32.gmra.mxu0 %v751
  %v818 = vpop.f32.mrf.mxu0
  %v819 = vadd.f32 0.0, %v818
  %820 = vmatmul.f32.gmra.mxu0 %v754
  %v821 = vpop.f32.mrf.mxu0
  %v822 = vadd.f32 0.0, %v821
  %823 = vmatmul.f32.gmra.mxu0 %v757
  %v824 = vpop.f32.mrf.mxu0
  %v825 = vadd.f32 0.0, %v824
  %826 = vmatmul.f32.gmra.mxu0 %v760
  %v827 = vpop.f32.mrf.mxu0
  %v828 = vadd.f32 0.0, %v827
  %829 = vmatmul.f32.gmra.mxu0 %v763
  %v830 = vpop.f32.mrf.mxu0
  %v831 = vadd.f32 0.0, %v830
  %832 = vmatmul.f32.gmra.mxu0 %v766
  %v833 = vpop.f32.mrf.mxu0
  %v834 = vadd.f32 0.0, %v833
  %835 = vmatmul.f32.gmra.mxu0 %v769
  %v836 = vpop.f32.mrf.mxu0
  %v837 = vadd.f32 0.0, %v836
  %838 = vdwg.mxu0
  %vm839 = vcmask 130048
  %v841 = vsel %vm839, %v401, 0
  %v844 = vsel %vm839, %v404, 0
  %v847 = vsel %vm839, %v407, 0
  %v850 = vsel %vm839, %v410, 0
  %v853 = vsel %vm839, %v413, 0
  %v856 = vsel %vm839, %v416, 0
  %v859 = vsel %vm839, %v419, 0
  %v862 = vsel %vm839, %v422, 0
  %v865 = vsel %vm839, %v425, 0
  %v868 = vsel %vm839, %v428, 0
  %v871 = vsel %vm839, %v431, 0
  %v874 = vsel %vm839, %v434, 0
  %v877 = vsel %vm839, %v437, 0
  %v880 = vsel %vm839, %v440, 0
  %v883 = vsel %vm839, %v443, 0
  %v886 = vsel %vm839, %v446, 0
  %888 = vmatpush.msra.mxu0 0.0
  %889 = vmatpush.msra.mxu0 0.0
  %890 = vmatpush.msra.mxu0 0.0
  %891 = vmatpush.msra.mxu0 0.0
  %892 = vmatpush.msra.mxu0 0.0
  %893 = vmatpush.msra.mxu0 0.0
  %894 = vmatpush.msra.mxu0 0.0
  %895 = vmatpush.msra.mxu0 0.0
  %896 = vmatpush.msra.mxu0 0.0
  %897 = vmatpush.msra.mxu0 0.0
  %898 = vmatpush.msra.mxu0 0.0
  %899 = vmatpush.msra.mxu0 0.0
  %900 = vmatpush.msra.mxu0 0.0
  %901 = vmatpush.msra.mxu0 0.0
  %902 = vmatpush.msra.mxu0 %v721
  %903 = vmatpush.msra.mxu0 %v720
  %904 = vmatmul.f32.gmra.mxu0 %v841
  %v905 = vpop.f32.mrf.mxu0
  %v906 = vadd.f32 %v792, %v905
  %907 = vmatmul.f32.gmra.mxu0 %v844
  %v908 = vpop.f32.mrf.mxu0
  %v909 = vadd.f32 %v795, %v908
  %910 = vmatmul.f32.gmra.mxu0 %v847
  %v911 = vpop.f32.mrf.mxu0
  %v912 = vadd.f32 %v798, %v911
  %913 = vmatmul.f32.gmra.mxu0 %v850
  %v914 = vpop.f32.mrf.mxu0
  %v915 = vadd.f32 %v801, %v914
  %916 = vmatmul.f32.gmra.mxu0 %v853
  %v917 = vpop.f32.mrf.mxu0
  %v918 = vadd.f32 %v804, %v917
  %919 = vmatmul.f32.gmra.mxu0 %v856
  %v920 = vpop.f32.mrf.mxu0
  %v921 = vadd.f32 %v807, %v920
  %922 = vmatmul.f32.gmra.mxu0 %v859
  %v923 = vpop.f32.mrf.mxu0
  %v924 = vadd.f32 %v810, %v923
  %925 = vmatmul.f32.gmra.mxu0 %v862
  %v926 = vpop.f32.mrf.mxu0
  %v927 = vadd.f32 %v813, %v926
  %928 = vmatmul.f32.gmra.mxu0 %v865
  %v929 = vpop.f32.mrf.mxu0
  %v930 = vadd.f32 %v816, %v929
  %931 = vmatmul.f32.gmra.mxu0 %v868
  %v932 = vpop.f32.mrf.mxu0
  %v933 = vadd.f32 %v819, %v932
  %934 = vmatmul.f32.gmra.mxu0 %v871
  %v935 = vpop.f32.mrf.mxu0
  %v936 = vadd.f32 %v822, %v935
  %937 = vmatmul.f32.gmra.mxu0 %v874
  %v938 = vpop.f32.mrf.mxu0
  %v939 = vadd.f32 %v825, %v938
  %940 = vmatmul.f32.gmra.mxu0 %v877
  %v941 = vpop.f32.mrf.mxu0
  %v942 = vadd.f32 %v828, %v941
  %943 = vmatmul.f32.gmra.mxu0 %v880
  %v944 = vpop.f32.mrf.mxu0
  %v945 = vadd.f32 %v831, %v944
  %946 = vmatmul.f32.gmra.mxu0 %v883
  %v947 = vpop.f32.mrf.mxu0
  %v948 = vadd.f32 %v834, %v947
  %949 = vmatmul.f32.gmra.mxu0 %v886
  %v950 = vpop.f32.mrf.mxu0
  %v951 = vadd.f32 %v837, %v950
  %952 = vdwg.mxu0
  %v953 = vld [vmem:[%s3 + $0x6c] sm:$0x1]
  %v954 = vperm.slane %v953, 0
  %v955 = vadd.f32 %v906, %v954
  %v956 = vadd.f32 %v909, %v954
  %v957 = vadd.f32 %v912, %v954
  %v958 = vadd.f32 %v915, %v954
  %v959 = vadd.f32 %v918, %v954
  %v960 = vadd.f32 %v921, %v954
  %v961 = vadd.f32 %v924, %v954
  %v962 = vadd.f32 %v927, %v954
  %v963 = vadd.f32 %v930, %v954
  %v964 = vadd.f32 %v933, %v954
  %v965 = vadd.f32 %v936, %v954
  %v966 = vadd.f32 %v939, %v954
  %v967 = vadd.f32 %v942, %v954
  %v968 = vadd.f32 %v945, %v954
  %v969 = vadd.f32 %v948, %v954
  %v970 = vadd.f32 %v951, %v954
  %vm971 = vcmask 15360
  %v972 = vsel %vm971, %v955, -inf
  %973 = vmax.xlane.f32.xlu0 %v972
  %v974 = vpop.xlane.xlu0 %973
  %v975 = vsel %vm971, %v956, -inf
  %976 = vmax.xlane.f32.xlu0 %v975
  %v977 = vpop.xlane.xlu0 %976
  %v978 = vsel %vm971, %v957, -inf
  %979 = vmax.xlane.f32.xlu0 %v978
  %v980 = vpop.xlane.xlu0 %979
  %v981 = vsel %vm971, %v958, -inf
  %982 = vmax.xlane.f32.xlu0 %v981
  %v983 = vpop.xlane.xlu0 %982
  %v984 = vsel %vm971, %v959, -inf
  %985 = vmax.xlane.f32.xlu0 %v984
  %v986 = vpop.xlane.xlu0 %985
  %v987 = vsel %vm971, %v960, -inf
  %988 = vmax.xlane.f32.xlu0 %v987
  %v989 = vpop.xlane.xlu0 %988
  %v990 = vsel %vm971, %v961, -inf
  %991 = vmax.xlane.f32.xlu0 %v990
  %v992 = vpop.xlane.xlu0 %991
  %v993 = vsel %vm971, %v962, -inf
  %994 = vmax.xlane.f32.xlu0 %v993
  %v995 = vpop.xlane.xlu0 %994
  %v996 = vsel %vm971, %v963, -inf
  %997 = vmax.xlane.f32.xlu0 %v996
  %v998 = vpop.xlane.xlu0 %997
  %v999 = vsel %vm971, %v964, -inf
  %1000 = vmax.xlane.f32.xlu0 %v999
  %v1001 = vpop.xlane.xlu0 %1000
  %v1002 = vsel %vm971, %v965, -inf
  %1003 = vmax.xlane.f32.xlu0 %v1002
  %v1004 = vpop.xlane.xlu0 %1003
  %v1005 = vsel %vm971, %v966, -inf
  %1006 = vmax.xlane.f32.xlu0 %v1005
  %v1007 = vpop.xlane.xlu0 %1006
  %v1008 = vsel %vm971, %v967, -inf
  %1009 = vmax.xlane.f32.xlu0 %v1008
  %v1010 = vpop.xlane.xlu0 %1009
  %v1011 = vsel %vm971, %v968, -inf
  %1012 = vmax.xlane.f32.xlu0 %v1011
  %v1013 = vpop.xlane.xlu0 %1012
  %v1014 = vsel %vm971, %v969, -inf
  %1015 = vmax.xlane.f32.xlu0 %v1014
  %v1016 = vpop.xlane.xlu0 %1015
  %v1017 = vsel %vm971, %v970, -inf
  %1018 = vmax.xlane.f32.xlu0 %v1017
  %v1019 = vpop.xlane.xlu0 %1018
  %v1020 = vsub.f32 %v955, %v974
  %v1021 = vsub.f32 %v956, %v977
  %v1022 = vsub.f32 %v957, %v980
  %v1023 = vsub.f32 %v958, %v983
  %v1024 = vsub.f32 %v959, %v986
  %v1025 = vsub.f32 %v960, %v989
  %v1026 = vsub.f32 %v961, %v992
  %v1027 = vsub.f32 %v962, %v995
  %v1028 = vsub.f32 %v963, %v998
  %v1029 = vsub.f32 %v964, %v1001
  %v1030 = vsub.f32 %v965, %v1004
  %v1031 = vsub.f32 %v966, %v1007
  %v1032 = vsub.f32 %v967, %v1010
  %v1033 = vsub.f32 %v968, %v1013
  %v1034 = vsub.f32 %v969, %v1016
  %v1035 = vsub.f32 %v970, %v1019
  %v1036 = vmul.f32 %v1020, 1.442695
  %v1037 = vpow.pop %v1036
  %v1038 = vmul.f32 %v1021, 1.442695
  %v1039 = vpow.pop %v1038
  %v1040 = vmul.f32 %v1022, 1.442695
  %v1041 = vpow.pop %v1040
  %v1042 = vmul.f32 %v1023, 1.442695
  %v1043 = vpow.pop %v1042
  %v1044 = vmul.f32 %v1024, 1.442695
  %v1045 = vpow.pop %v1044
  %v1046 = vmul.f32 %v1025, 1.442695
  %v1047 = vpow.pop %v1046
  %v1048 = vmul.f32 %v1026, 1.442695
  %v1049 = vpow.pop %v1048
  %v1050 = vmul.f32 %v1027, 1.442695
  %v1051 = vpow.pop %v1050
  %v1052 = vmul.f32 %v1028, 1.442695
  %v1053 = vpow.pop %v1052
  %v1054 = vmul.f32 %v1029, 1.442695
  %v1055 = vpow.pop %v1054
  %v1056 = vmul.f32 %v1030, 1.442695
  %v1057 = vpow.pop %v1056
  %v1058 = vmul.f32 %v1031, 1.442695
  %v1059 = vpow.pop %v1058
  %v1060 = vmul.f32 %v1032, 1.442695
  %v1061 = vpow.pop %v1060
  %v1062 = vmul.f32 %v1033, 1.442695
  %v1063 = vpow.pop %v1062
  %v1064 = vmul.f32 %v1034, 1.442695
  %v1065 = vpow.pop %v1064
  %v1066 = vmul.f32 %v1035, 1.442695
  %v1067 = vpow.pop %v1066
  %v1068 = vsel %vm971, %v1037, 0.0
  %1069 = vadd.xlane.f32.xlu0 %v1068
  %v1070 = vpop.xlane.xlu0 %1069
  %v1071 = vsel %vm971, %v1039, 0.0
  %1072 = vadd.xlane.f32.xlu0 %v1071
  %v1073 = vpop.xlane.xlu0 %1072
  %v1074 = vsel %vm971, %v1041, 0.0
  %1075 = vadd.xlane.f32.xlu0 %v1074
  %v1076 = vpop.xlane.xlu0 %1075
  %v1077 = vsel %vm971, %v1043, 0.0
  %1078 = vadd.xlane.f32.xlu0 %v1077
  %v1079 = vpop.xlane.xlu0 %1078
  %v1080 = vsel %vm971, %v1045, 0.0
  %1081 = vadd.xlane.f32.xlu0 %v1080
  %v1082 = vpop.xlane.xlu0 %1081
  %v1083 = vsel %vm971, %v1047, 0.0
  %1084 = vadd.xlane.f32.xlu0 %v1083
  %v1085 = vpop.xlane.xlu0 %1084
  %v1086 = vsel %vm971, %v1049, 0.0
  %1087 = vadd.xlane.f32.xlu0 %v1086
  %v1088 = vpop.xlane.xlu0 %1087
  %v1089 = vsel %vm971, %v1051, 0.0
  %1090 = vadd.xlane.f32.xlu0 %v1089
  %v1091 = vpop.xlane.xlu0 %1090
  %v1092 = vsel %vm971, %v1053, 0.0
  %1093 = vadd.xlane.f32.xlu0 %v1092
  %v1094 = vpop.xlane.xlu0 %1093
  %v1095 = vsel %vm971, %v1055, 0.0
  %1096 = vadd.xlane.f32.xlu0 %v1095
  %v1097 = vpop.xlane.xlu0 %1096
  %v1098 = vsel %vm971, %v1057, 0.0
  %1099 = vadd.xlane.f32.xlu0 %v1098
  %v1100 = vpop.xlane.xlu0 %1099
  %v1101 = vsel %vm971, %v1059, 0.0
  %1102 = vadd.xlane.f32.xlu0 %v1101
  %v1103 = vpop.xlane.xlu0 %1102
  %v1104 = vsel %vm971, %v1061, 0.0
  %1105 = vadd.xlane.f32.xlu0 %v1104
  %v1106 = vpop.xlane.xlu0 %1105
  %v1107 = vsel %vm971, %v1063, 0.0
  %1108 = vadd.xlane.f32.xlu0 %v1107
  %v1109 = vpop.xlane.xlu0 %1108
  %v1110 = vsel %vm971, %v1065, 0.0
  %1111 = vadd.xlane.f32.xlu0 %v1110
  %v1112 = vpop.xlane.xlu0 %1111
  %v1113 = vsel %vm971, %v1067, 0.0
  %1114 = vadd.xlane.f32.xlu0 %v1113
  %v1115 = vpop.xlane.xlu0 %1114
  %v1116 = vrcp.pop %v1070
  %v1117 = vmul.f32 %v1070, %v1116
  %v1118 = vsub.f32 1.0, %v1117
  %v1119 = vmul.f32 %v1116, %v1118
  %v1120 = vadd.f32 %v1116, %v1119
  %vm1121 = vweird.f32 %v1070
  %vm1122 = vweird.f32 %v1116
  %vm1123 = vmor %vm1121, %vm1122
  %v1124 = vsel %vm1123, %v1116, %v1120
  %v1125 = vand.u32 2147483647, %v1070
  %vm1126 = vcmp.eq.f32.partialorder %v1125, 8.507059e+37
  %v1127 = vand.u32 %v1070, 2147483648
  %v1128 = vor.u32 1.1754944e-38, %v1127
  %v1129 = vsel %vm1126, %v1128, %v1124
  %v1130 = vrcp.pop %v1073
  %v1131 = vmul.f32 %v1073, %v1130
  %v1132 = vsub.f32 1.0, %v1131
  %v1133 = vmul.f32 %v1130, %v1132
  %v1134 = vadd.f32 %v1130, %v1133
  %vm1135 = vweird.f32 %v1073
  %vm1136 = vweird.f32 %v1130
  %vm1137 = vmor %vm1135, %vm1136
  %v1138 = vsel %vm1137, %v1130, %v1134
  %v1139 = vand.u32 2147483647, %v1073
  %vm1140 = vcmp.eq.f32.partialorder %v1139, 8.507059e+37
  %v1141 = vand.u32 %v1073, 2147483648
  %v1142 = vor.u32 1.1754944e-38, %v1141
  %v1143 = vsel %vm1140, %v1142, %v1138
  %v1144 = vrcp.pop %v1076
  %v1145 = vmul.f32 %v1076, %v1144
  %v1146 = vsub.f32 1.0, %v1145
  %v1147 = vmul.f32 %v1144, %v1146
  %v1148 = vadd.f32 %v1144, %v1147
  %vm1149 = vweird.f32 %v1076
  %vm1150 = vweird.f32 %v1144
  %vm1151 = vmor %vm1149, %vm1150
  %v1152 = vsel %vm1151, %v1144, %v1148
  %v1153 = vand.u32 2147483647, %v1076
  %vm1154 = vcmp.eq.f32.partialorder %v1153, 8.507059e+37
  %v1155 = vand.u32 %v1076, 2147483648
  %v1156 = vor.u32 1.1754944e-38, %v1155
  %v1157 = vsel %vm1154, %v1156, %v1152
  %v1158 = vrcp.pop %v1079
  %v1159 = vmul.f32 %v1079, %v1158
  %v1160 = vsub.f32 1.0, %v1159
  %v1161 = vmul.f32 %v1158, %v1160
  %v1162 = vadd.f32 %v1158, %v1161
  %vm1163 = vweird.f32 %v1079
  %vm1164 = vweird.f32 %v1158
  %vm1165 = vmor %vm1163, %vm1164
  %v1166 = vsel %vm1165, %v1158, %v1162
  %v1167 = vand.u32 2147483647, %v1079
  %vm1168 = vcmp.eq.f32.partialorder %v1167, 8.507059e+37
  %v1169 = vand.u32 %v1079, 2147483648
  %v1170 = vor.u32 1.1754944e-38, %v1169
  %v1171 = vsel %vm1168, %v1170, %v1166
  %v1172 = vrcp.pop %v1082
  %v1173 = vmul.f32 %v1082, %v1172
  %v1174 = vsub.f32 1.0, %v1173
  %v1175 = vmul.f32 %v1172, %v1174
  %v1176 = vadd.f32 %v1172, %v1175
  %vm1177 = vweird.f32 %v1082
  %vm1178 = vweird.f32 %v1172
  %vm1179 = vmor %vm1177, %vm1178
  %v1180 = vsel %vm1179, %v1172, %v1176
  %v1181 = vand.u32 2147483647, %v1082
  %vm1182 = vcmp.eq.f32.partialorder %v1181, 8.507059e+37
  %v1183 = vand.u32 %v1082, 2147483648
  %v1184 = vor.u32 1.1754944e-38, %v1183
  %v1185 = vsel %vm1182, %v1184, %v1180
  %v1186 = vrcp.pop %v1085
  %v1187 = vmul.f32 %v1085, %v1186
  %v1188 = vsub.f32 1.0, %v1187
  %v1189 = vmul.f32 %v1186, %v1188
  %v1190 = vadd.f32 %v1186, %v1189
  %vm1191 = vweird.f32 %v1085
  %vm1192 = vweird.f32 %v1186
  %vm1193 = vmor %vm1191, %vm1192
  %v1194 = vsel %vm1193, %v1186, %v1190
  %v1195 = vand.u32 2147483647, %v1085
  %vm1196 = vcmp.eq.f32.partialorder %v1195, 8.507059e+37
  %v1197 = vand.u32 %v1085, 2147483648
  %v1198 = vor.u32 1.1754944e-38, %v1197
  %v1199 = vsel %vm1196, %v1198, %v1194
  %v1200 = vrcp.pop %v1088
  %v1201 = vmul.f32 %v1088, %v1200
  %v1202 = vsub.f32 1.0, %v1201
  %v1203 = vmul.f32 %v1200, %v1202
  %v1204 = vadd.f32 %v1200, %v1203
  %vm1205 = vweird.f32 %v1088
  %vm1206 = vweird.f32 %v1200
  %vm1207 = vmor %vm1205, %vm1206
  %v1208 = vsel %vm1207, %v1200, %v1204
  %v1209 = vand.u32 2147483647, %v1088
  %vm1210 = vcmp.eq.f32.partialorder %v1209, 8.507059e+37
  %v1211 = vand.u32 %v1088, 2147483648
  %v1212 = vor.u32 1.1754944e-38, %v1211
  %v1213 = vsel %vm1210, %v1212, %v1208
  %v1214 = vrcp.pop %v1091
  %v1215 = vmul.f32 %v1091, %v1214
  %v1216 = vsub.f32 1.0, %v1215
  %v1217 = vmul.f32 %v1214, %v1216
  %v1218 = vadd.f32 %v1214, %v1217
  %vm1219 = vweird.f32 %v1091
  %vm1220 = vweird.f32 %v1214
  %vm1221 = vmor %vm1219, %vm1220
  %v1222 = vsel %vm1221, %v1214, %v1218
  %v1223 = vand.u32 2147483647, %v1091
  %vm1224 = vcmp.eq.f32.partialorder %v1223, 8.507059e+37
  %v1225 = vand.u32 %v1091, 2147483648
  %v1226 = vor.u32 1.1754944e-38, %v1225
  %v1227 = vsel %vm1224, %v1226, %v1222
  %v1228 = vrcp.pop %v1094
  %v1229 = vmul.f32 %v1094, %v1228
  %v1230 = vsub.f32 1.0, %v1229
  %v1231 = vmul.f32 %v1228, %v1230
  %v1232 = vadd.f32 %v1228, %v1231
  %vm1233 = vweird.f32 %v1094
  %vm1234 = vweird.f32 %v1228
  %vm1235 = vmor %vm1233, %vm1234
  %v1236 = vsel %vm1235, %v1228, %v1232
  %v1237 = vand.u32 2147483647, %v1094
  %vm1238 = vcmp.eq.f32.partialorder %v1237, 8.507059e+37
  %v1239 = vand.u32 %v1094, 2147483648
  %v1240 = vor.u32 1.1754944e-38, %v1239
  %v1241 = vsel %vm1238, %v1240, %v1236
  %v1242 = vrcp.pop %v1097
  %v1243 = vmul.f32 %v1097, %v1242
  %v1244 = vsub.f32 1.0, %v1243
  %v1245 = vmul.f32 %v1242, %v1244
  %v1246 = vadd.f32 %v1242, %v1245
  %vm1247 = vweird.f32 %v1097
  %vm1248 = vweird.f32 %v1242
  %vm1249 = vmor %vm1247, %vm1248
  %v1250 = vsel %vm1249, %v1242, %v1246
  %v1251 = vand.u32 2147483647, %v1097
  %vm1252 = vcmp.eq.f32.partialorder %v1251, 8.507059e+37
  %v1253 = vand.u32 %v1097, 2147483648
  %v1254 = vor.u32 1.1754944e-38, %v1253
  %v1255 = vsel %vm1252, %v1254, %v1250
  %v1256 = vrcp.pop %v1100
  %v1257 = vmul.f32 %v1100, %v1256
  %v1258 = vsub.f32 1.0, %v1257
  %v1259 = vmul.f32 %v1256, %v1258
  %v1260 = vadd.f32 %v1256, %v1259
  %vm1261 = vweird.f32 %v1100
  %vm1262 = vweird.f32 %v1256
  %vm1263 = vmor %vm1261, %vm1262
  %v1264 = vsel %vm1263, %v1256, %v1260
  %v1265 = vand.u32 2147483647, %v1100
  %vm1266 = vcmp.eq.f32.partialorder %v1265, 8.507059e+37
  %v1267 = vand.u32 %v1100, 2147483648
  %v1268 = vor.u32 1.1754944e-38, %v1267
  %v1269 = vsel %vm1266, %v1268, %v1264
  %v1270 = vrcp.pop %v1103
  %v1271 = vmul.f32 %v1103, %v1270
  %v1272 = vsub.f32 1.0, %v1271
  %v1273 = vmul.f32 %v1270, %v1272
  %v1274 = vadd.f32 %v1270, %v1273
  %vm1275 = vweird.f32 %v1103
  %vm1276 = vweird.f32 %v1270
  %vm1277 = vmor %vm1275, %vm1276
  %v1278 = vsel %vm1277, %v1270, %v1274
  %v1279 = vand.u32 2147483647, %v1103
  %vm1280 = vcmp.eq.f32.partialorder %v1279, 8.507059e+37
  %v1281 = vand.u32 %v1103, 2147483648
  %v1282 = vor.u32 1.1754944e-38, %v1281
  %v1283 = vsel %vm1280, %v1282, %v1278
  %v1284 = vrcp.pop %v1106
  %v1285 = vmul.f32 %v1106, %v1284
  %v1286 = vsub.f32 1.0, %v1285
  %v1287 = vmul.f32 %v1284, %v1286
  %v1288 = vadd.f32 %v1284, %v1287
  %vm1289 = vweird.f32 %v1106
  %vm1290 = vweird.f32 %v1284
  %vm1291 = vmor %vm1289, %vm1290
  %v1292 = vsel %vm1291, %v1284, %v1288
  %v1293 = vand.u32 2147483647, %v1106
  %vm1294 = vcmp.eq.f32.partialorder %v1293, 8.507059e+37
  %v1295 = vand.u32 %v1106, 2147483648
  %v1296 = vor.u32 1.1754944e-38, %v1295
  %v1297 = vsel %vm1294, %v1296, %v1292
  %v1298 = vrcp.pop %v1109
  %v1299 = vmul.f32 %v1109, %v1298
  %v1300 = vsub.f32 1.0, %v1299
  %v1301 = vmul.f32 %v1298, %v1300
  %v1302 = vadd.f32 %v1298, %v1301
  %vm1303 = vweird.f32 %v1109
  %vm1304 = vweird.f32 %v1298
  %vm1305 = vmor %vm1303, %vm1304
  %v1306 = vsel %vm1305, %v1298, %v1302
  %v1307 = vand.u32 2147483647, %v1109
  %vm1308 = vcmp.eq.f32.partialorder %v1307, 8.507059e+37
  %v1309 = vand.u32 %v1109, 2147483648
  %v1310 = vor.u32 1.1754944e-38, %v1309
  %v1311 = vsel %vm1308, %v1310, %v1306
  %v1312 = vrcp.pop %v1112
  %v1313 = vmul.f32 %v1112, %v1312
  %v1314 = vsub.f32 1.0, %v1313
  %v1315 = vmul.f32 %v1312, %v1314
  %v1316 = vadd.f32 %v1312, %v1315
  %vm1317 = vweird.f32 %v1112
  %vm1318 = vweird.f32 %v1312
  %vm1319 = vmor %vm1317, %vm1318
  %v1320 = vsel %vm1319, %v1312, %v1316
  %v1321 = vand.u32 2147483647, %v1112
  %vm1322 = vcmp.eq.f32.partialorder %v1321, 8.507059e+37
  %v1323 = vand.u32 %v1112, 2147483648
  %v1324 = vor.u32 1.1754944e-38, %v1323
  %v1325 = vsel %vm1322, %v1324, %v1320
  %v1326 = vrcp.pop %v1115
  %v1327 = vmul.f32 %v1115, %v1326
  %v1328 = vsub.f32 1.0, %v1327
  %v1329 = vmul.f32 %v1326, %v1328
  %v1330 = vadd.f32 %v1326, %v1329
  %vm1331 = vweird.f32 %v1115
  %vm1332 = vweird.f32 %v1326
  %vm1333 = vmor %vm1331, %vm1332
  %v1334 = vsel %vm1333, %v1326, %v1330
  %v1335 = vand.u32 2147483647, %v1115
  %vm1336 = vcmp.eq.f32.partialorder %v1335, 8.507059e+37
  %v1337 = vand.u32 %v1115, 2147483648
  %v1338 = vor.u32 1.1754944e-38, %v1337
  %v1339 = vsel %vm1336, %v1338, %v1334
  %v1340 = vmul.f32 %v1037, %v1129
  %v1341 = vmul.f32 %v1039, %v1143
  %v1342 = vmul.f32 %v1041, %v1157
  %v1343 = vmul.f32 %v1043, %v1171
  %v1344 = vmul.f32 %v1045, %v1185
  %v1345 = vmul.f32 %v1047, %v1199
  %v1346 = vmul.f32 %v1049, %v1213
  %v1347 = vmul.f32 %v1051, %v1227
  %v1348 = vmul.f32 %v1053, %v1241
  %v1349 = vmul.f32 %v1055, %v1255
  %v1350 = vmul.f32 %v1057, %v1269
  %v1351 = vmul.f32 %v1059, %v1283
  %v1352 = vmul.f32 %v1061, %v1297
  %v1353 = vmul.f32 %v1063, %v1311
  %v1354 = vmul.f32 %v1065, %v1325
  %v1355 = vmul.f32 %v1067, %v1339
  %1356 = vst.msk [vmem:[%s4] sm:$0xff] %vm971, %v1340
  %1357 = vst.msk [vmem:[%s4 + $0x8] sm:$0xff] %vm971, %v1341
  %1358 = vst.msk [vmem:[%s4 + $0x10] sm:$0xff] %vm971, %v1342
  %1359 = vst.msk [vmem:[%s4 + $0x18] sm:$0xff] %vm971, %v1343
  %1360 = vst.msk [vmem:[%s4 + $0x20] sm:$0xff] %vm971, %v1344
  %1361 = vst.msk [vmem:[%s4 + $0x28] sm:$0xff] %vm971, %v1345
  %1362 = vst.msk [vmem:[%s4 + $0x30] sm:$0xff] %vm971, %v1346
  %1363 = vst.msk [vmem:[%s4 + $0x38] sm:$0xff] %vm971, %v1347
  %1364 = vst.msk [vmem:[%s4 + $0x40] sm:$0xff] %vm971, %v1348
  %1365 = vst.msk [vmem:[%s4 + $0x48] sm:$0xff] %vm971, %v1349
  %1366 = vst.msk [vmem:[%s4 + $0x50] sm:$0xff] %vm971, %v1350
  %1367 = vst.msk [vmem:[%s4 + $0x58] sm:$0xff] %vm971, %v1351
  %1368 = vst.msk [vmem:[%s4 + $0x60] sm:$0xff] %vm971, %v1352
  %1369 = vst.msk [vmem:[%s4 + $0x68] sm:$0xff] %vm971, %v1353
  %1370 = vst.msk [vmem:[%s4 + $0x70] sm:$0xff] %vm971, %v1354
  %1371 = vst.msk [vmem:[%s4 + $0x78] sm:$0xff] %vm971, %v1355
  // Predicated region
  $region18: #{gcn_forward.1} parent=0 // pred_check
    _
  $region19: #{gcn_forward.1} parent=0 // pred_check_branch
    %1373 = sbr.rel (0) target = $region21
  $region20: #{gcn_forward.1} parent=0 // pred_region
    _
  $region21: #{gcn_forward.1} parent=0 // pred_fallthru
    _
  // Predicated region
  $region22: #{gcn_forward.1} parent=0 // pred_check
    _
  $region23: #{gcn_forward.1} parent=0 // pred_check_branch
    %1375 = sbr.rel (0) target = $region25
  $region24: #{gcn_forward.1} parent=0 // pred_region
    _
  $region25: #{gcn_forward.1} parent=0 // pred_fallthru
    _

</llo_original>
